<compile_context>
chip_gen: v7x
topology: tpu7x:2x2x1
jax: 0.10.0
libtpu: 0.0.40
codegen_flags: <defaults>
</compile_context>

<pallas_src>
import jax
import jax.numpy as jnp
from jax.experimental import pallas as pl
from jax.experimental.pallas import tpu as pltpu


_TM_CAP = 1024  # upper bound on the row tile; larger rarely helps the MXU


# -----------------------------------------------------------------------------
# Hardware- / dtype-aware helpers
# -----------------------------------------------------------------------------
def _round_up(x, m):
    return ((x + m - 1) // m) * m


def _tpu_limits():
    """(tile_budget_bytes, vmem_limit_bytes, multi_tensorcore) per generation."""
    vmem_cap = 64 << 20  # conservative default: v7x-class per-TC VMEM
    try:
        vmem_cap = int(pltpu.get_tpu_info().vmem_capacity_bytes)
    except Exception:
        pass
    if vmem_cap >= (100 << 20):
        # v5e / v6e: 128 MiB VMEM, single TensorCore per chip.
        return 96 << 20, 104 << 20, False
    # v7x-class: 64 MiB per-TC VMEM, 2 TensorCores per chip. Leave headroom
    # for compiler-internal scratch, semaphores and DMA descriptors.
    return 44 << 20, 56 << 20, True


def _sublane_align(dtype):
    # 8 sublanes of 32 bit; packed dtypes need proportionally more rows per vreg.
    return max(8, 32 // jnp.dtype(dtype).itemsize)


def _tile_candidates(dim, align=128, prefer=256):
    """Descending tile sizes t with dim % t == 0 and (t % align == 0 or t == dim).

    Multiples of `prefer` (256: v6e/v7x MXU panel width) are included too."""
    cands = {dim}
    for unit in (prefer, align):
        t = unit
        while t < dim:
            if dim % t == 0:
                cands.add(t)
            t += unit
    return sorted(cands, reverse=True)


# -----------------------------------------------------------------------------
# Planning (pure Python, trace time): pick tiles and estimate HBM traffic
# -----------------------------------------------------------------------------
def _plan_weight_resident(Mp, K, N, in_b, out_b, budget, align_m):
    """Path A: full-K weight panel resident in VMEM, no reduction grid axis."""
    best = None
    for tn in _tile_candidates(N):
        w_bufs = 1 if tn == N else 2            # grid-invariant -> single buffer
        fixed = (w_bufs * K * tn + 2 * tn) * in_b
        per_row = 2 * K * in_b + 2 * tn * out_b  # x panel + out tile, double buffered
        tm = min(_TM_CAP, _round_up(Mp, align_m),
                 ((budget - fixed) // per_row) // align_m * align_m)
        if tm < align_m:
            continue
        n_col = N // tn
        # weight streamed exactly once; x re-streamed once per column panel
        traffic = (n_col * Mp * K + K * N) * in_b + Mp * N * out_b
        if best is None or traffic < best["traffic"]:
            best = dict(tm=tm, tn=tn, traffic=traffic, w_single=(tn == N))
    return best


def _plan_k_tiled(Mp, K, N, in_b, out_b, budget, align_m):
    """Path B: K reduction grid axis with an f32 VMEM accumulator."""
    tn_opts = _tile_candidates(N)
    tk_opts = [t for t in _tile_candidates(K) if t <= 2048] or [min(_tile_candidates(K))]
    best = None
    for tn in tn_opts:
        for tk in tk_opts:
            fixed = 2 * (tk * tn + tn) * in_b
            per_row = 2 * tk * in_b + 2 * tn * out_b + tn * 4  # + f32 acc
            tm = min(_TM_CAP, _round_up(Mp, align_m),
                     ((budget - fixed) // per_row) // align_m * align_m)
            if tm < align_m:
                continue
            traffic = ((N // tn) * Mp * K + pl.cdiv(Mp, tm) * K * N) * in_b \
                + Mp * N * out_b
            key = (traffic, -(tm * tn * tk))
            if best is None or key < best["key"]:
                best = dict(tm=tm, tn=tn, tk=tk, traffic=traffic, key=key)
    if best is None:
        # Guaranteed (possibly slow) fallback for pathological shapes.
        tn, tk, tm = min(tn_opts), min(tk_opts), align_m
        traffic = ((N // tn) * Mp * K + pl.cdiv(Mp, tm) * K * N) * in_b \
            + Mp * N * out_b
        best = dict(tm=tm, tn=tn, tk=tk, traffic=traffic, key=(traffic, 0))
    return best


# -----------------------------------------------------------------------------
# Kernels
# -----------------------------------------------------------------------------
def _wres_kernel(x_ref, w_ref, b_ref, o_ref):
    # Weight-resident path: single MXU pass over full K, bias fused in f32.
    acc = jnp.dot(x_ref[...], w_ref[...], preferred_element_type=jnp.float32)
    o_ref[...] = (acc + b_ref[...].astype(jnp.float32)).astype(o_ref.dtype)


def _ktiled_kernel(x_ref, w_ref, b_ref, o_ref, acc_ref):
    # Reduction over the last grid axis with an f32 VMEM accumulator.
    k = pl.program_id(2)

    @pl.when(k == 0)
    def _():
        acc_ref[...] = jnp.zeros_like(acc_ref)

    acc_ref[...] += jnp.dot(x_ref[...], w_ref[...],
                            preferred_element_type=jnp.float32)

    @pl.when(k == pl.num_programs(2) - 1)
    def _():
        o_ref[...] = (acc_ref[...] + b_ref[...].astype(jnp.float32)).astype(o_ref.dtype)


# -----------------------------------------------------------------------------
# pallas_call drivers
# -----------------------------------------------------------------------------
def _run_weight_resident(x2d, weight, bias2d, plan, M, K, N, vmem_limit):
    tm, tn = plan["tm"], plan["tn"]
    Mp = _round_up(M, tm)
    if Mp != M:
        x2d = jnp.pad(x2d, ((0, Mp - M), (0, 0)))

    if plan["w_single"]:
        # Grid-invariant weight panel: one VMEM buffer is enough.
        w_spec = pl.BlockSpec((K, tn), lambda c, r: (0, c),
                              pipeline_mode=pl.Buffered(1))
    else:
        w_spec = pl.BlockSpec((K, tn), lambda c, r: (0, c))

    cost = pl.CostEstimate(flops=2 * Mp * N * K, transcendentals=0,
                           bytes_accessed=plan["traffic"])
    out2d = pl.pallas_call(
        _wres_kernel,
        out_shape=jax.ShapeDtypeStruct((Mp, N), x2d.dtype),
        grid_spec=pltpu.PrefetchScalarGridSpec(
            num_scalar_prefetch=0,
            # Column panels on the slow axis: the (K, tn) weight panel is
            # fetched once per column panel (K*N bytes total); the x row panel
            # streams on the fast axis.
            grid=(N // tn, Mp // tm),
            in_specs=[
                pl.BlockSpec((tm, K), lambda c, r: (r, 0)),   # x row panel
                w_spec,                                       # full-K weight panel
                pl.BlockSpec((1, tn), lambda c, r: (0, c)),   # bias
            ],
            out_specs=pl.BlockSpec((tm, tn), lambda c, r: (r, c)),
        ),
        compiler_params=pltpu.CompilerParams(
            dimension_semantics=("parallel", "parallel"),
            vmem_limit_bytes=vmem_limit),
        cost_estimate=cost,
    )(x2d, weight, bias2d)
    return out2d[:M]


def _run_k_tiled(x2d, weight, bias2d, plan, M, K, N, vmem_limit):
    tm, tn, tk = plan["tm"], plan["tn"], plan["tk"]
    Mp = _round_up(M, tm)
    if Mp != M:
        x2d = jnp.pad(x2d, ((0, Mp - M), (0, 0)))

    cost = pl.CostEstimate(flops=2 * Mp * N * K, transcendentals=0,
                           bytes_accessed=plan["traffic"])
    out2d = pl.pallas_call(
        _ktiled_kernel,
        out_shape=jax.ShapeDtypeStruct((Mp, N), x2d.dtype),
        grid_spec=pltpu.PrefetchScalarGridSpec(
            num_scalar_prefetch=0,
            grid=(Mp // tm, N // tn, K // tk),
            in_specs=[
                pl.BlockSpec((tm, tk), lambda i, j, k: (i, k)),   # x tile
                pl.BlockSpec((tk, tn), lambda i, j, k: (k, j)),   # w tile
                pl.BlockSpec((1, tn), lambda i, j, k: (0, j)),    # bias tile
            ],
            out_specs=pl.BlockSpec((tm, tn), lambda i, j, k: (i, j)),
            scratch_shapes=[pltpu.VMEM((tm, tn), jnp.float32)],
        ),
        compiler_params=pltpu.CompilerParams(
            dimension_semantics=("parallel", "parallel", "arbitrary"),
            vmem_limit_bytes=vmem_limit),
        cost_estimate=cost,
    )(x2d, weight, bias2d)
    return out2d[:M]


# -----------------------------------------------------------------------------
# Public wrapper
# -----------------------------------------------------------------------------
def albert_output_forward(hidden_states, weight, bias):
    """hidden_states: (B, S, K); weight: (K, N); bias: (N,) -> (B, S, N)."""
    B, S, K = hidden_states.shape
    Kw, N = weight.shape
    assert K == Kw, (K, Kw)
    M = B * S

    x2d = hidden_states.reshape(M, K)
    bias2d = bias.reshape(1, N)

    in_b = jnp.dtype(hidden_states.dtype).itemsize
    out_b = in_b
    budget, vmem_limit, multi_tc = _tpu_limits()
    align_m = _sublane_align(hidden_states.dtype)
    Mp0 = _round_up(M, align_m)

    plan_a = _plan_weight_resident(Mp0, K, N, in_b, out_b, budget, align_m)
    plan_b = _plan_k_tiled(Mp0, K, N, in_b, out_b, budget, align_m)

    use_a = plan_a is not None and (plan_b is None
                                    or plan_a["traffic"] <= plan_b["traffic"])

    if use_a:
        if multi_tc:
            # v7x: give each TensorCore several grid steps so per-core DMA can
            # still overlap compute; single-TC chips keep the biggest MXU pass.
            tm, tn = plan_a["tm"], plan_a["tn"]
            while (N // tn) * pl.cdiv(Mp0, tm) < 8 and tm % (2 * align_m) == 0:
                tm //= 2
            plan_a["tm"] = tm
        out2d = _run_weight_resident(x2d, weight, bias2d, plan_a, M, K, N, vmem_limit)
    else:
        out2d = _run_k_tiled(x2d, weight, bias2d, plan_b, M, K, N, vmem_limit)

    return out2d.reshape(B, S, N)


if __name__ == "__main__":
    # Small config consistent with AlbertOutput: intermediate_size -> hidden_size.
    batch, seq = 2, 8
    intermediate_size = 512
    hidden_size = 128

    key = jax.random.PRNGKey(0)
    kx, kw, kb = jax.random.split(key, 3)

    hidden_states = jax.random.normal(
        kx, (batch, seq, intermediate_size), dtype=jnp.float32)
    bound = 1.0 / (intermediate_size ** 0.5)
    weight = jax.random.uniform(
        kw, (intermediate_size, hidden_size), minval=-bound, maxval=bound,
        dtype=jnp.float32)
    bias = jax.random.uniform(
        kb, (hidden_size,), minval=-bound, maxval=bound, dtype=jnp.float32)

    out = albert_output_forward(hidden_states, weight, bias)
    out = jax.block_until_ready(out)

    # Reference check in plain JAX (dense + eval-mode dropout = identity).
    ref = jnp.einsum("bsk,kn->bsn", hidden_states, weight) + bias
    assert out.shape == (batch, seq, hidden_size)
    assert jnp.allclose(out, ref, atol=1e-4, rtol=1e-4), float(
        jnp.max(jnp.abs(out - ref)))

    print("KERNEL_OK")
</pallas_src>

<mosaic_0001>
module attributes {stable_mosaic.version = 11 : i64} {
  func.func @_wres_kernel(%arg0: i32, %arg1: i32, %arg2: memref<8x512xf32, #tpu.memory_space<vmem>>, %arg3: memref<512x128xf32, #tpu.memory_space<vmem>>, %arg4: memref<1x128xf32, #tpu.memory_space<vmem>>, %arg5: memref<8x128xf32, #tpu.memory_space<vmem>>) attributes {dimension_semantics = [#tpu.dimension_semantics<parallel>, #tpu.dimension_semantics<parallel>], iteration_bounds = array<i64: 1, 2>, scalar_prefetch = 0 : i64, scratch_operands = 0 : i64, tpu.core_type = #tpu.core_type<tc>, window_params = [{transform_indices = @transform_0, window_bounds = array<i64: 8, 512>}, {pipeline_mode = #tpu.pipeline_mode<synchronous>, transform_indices = @transform_1, window_bounds = array<i64: 512, 128>}, {transform_indices = @transform_2, window_bounds = array<i64: 1, 128>}, {transform_indices = @transform_3, window_bounds = array<i64: 8, 128>}]} {
    %c0 = arith.constant 0 : index
    %c0_0 = arith.constant 0 : index
    %0 = vector.load %arg2[%c0, %c0_0] : memref<8x512xf32, #tpu.memory_space<vmem>>, vector<8x512xf32>
    %c0_1 = arith.constant 0 : index
    %c0_2 = arith.constant 0 : index
    %1 = vector.load %arg3[%c0_1, %c0_2] : memref<512x128xf32, #tpu.memory_space<vmem>>, vector<512x128xf32>
    %cst = arith.constant dense<0.000000e+00> : vector<8x128xf32>
    %2 = tpu.matmul %0, %1, %cst {dimension_numbers = #tpu.dot_dimension_numbers<[1], [0], [0], [1], [0, 0, 1, 1], [], []>} : vector<8x512xf32>, vector<512x128xf32>, vector<8x128xf32> -> vector<8x128xf32>
    %c0_3 = arith.constant 0 : index
    %c0_4 = arith.constant 0 : index
    %3 = vector.load %arg4[%c0_3, %c0_4] : memref<1x128xf32, #tpu.memory_space<vmem>>, vector<1x128xf32>
    %4 = vector.broadcast %3 : vector<1x128xf32> to vector<8x128xf32>
    %5 = arith.addf %2, %4 : vector<8x128xf32>
    %c0_5 = arith.constant 0 : index
    %c0_6 = arith.constant 0 : index
    %6 = vector.load %arg5[%c0_5, %c0_6] : memref<8x128xf32, #tpu.memory_space<vmem>>, vector<8x128xf32>
    tpu.vector_store %arg5[%c0_5, %c0_6], %5 {strides = array<i32>} : memref<8x128xf32, #tpu.memory_space<vmem>>, vector<8x128xf32>,
    return
  }
  func.func @transform_0(%arg0: i32, %arg1: i32) -> (i32, i32) {
    %c0_i32 = arith.constant 0 : i32
    %c0_i32_0 = arith.constant 0 : i32
    return %arg1, %c0_i32 : i32, i32
  }
  func.func @transform_1(%arg0: i32, %arg1: i32) -> (i32, i32) {
    %c0_i32 = arith.constant 0 : i32
    %c0_i32_0 = arith.constant 0 : i32
    return %c0_i32, %arg0 : i32, i32
  }
  func.func @transform_2(%arg0: i32, %arg1: i32) -> (i32, i32) {
    %c0_i32 = arith.constant 0 : i32
    %c0_i32_0 = arith.constant 0 : i32
    return %c0_i32, %arg0 : i32, i32
  }
  func.func @transform_3(%arg0: i32, %arg1: i32) -> (i32, i32) {
    %c0_i32 = arith.constant 0 : i32
    return %arg1, %arg0 : i32, i32
  }
}

</mosaic_0001>

<llo_original>
// kernel: tpu_custom_call.1
$region0: #{tpu_custom_call.1}
  #allocation0 [shape = 'u32[]', space=smem, size = 0x4, offset = 0x4, fixed_abs, tag = 'smem constant byte address 0x4 - core index']
  #allocation1 [shape = 'u32[144,128]{1,0:T(1,128)}', space=vmem, size = 0x12000, scoped, tag = 'internal scratch']
  %s0 = inlined_call_operand.hbm [shape: f32[16,512], index: 0, kind: input, shape index: {}]
  %s1 = inlined_call_operand.hbm [shape: f32[512,128], index: 1, kind: input, shape index: {}]
  %s2 = inlined_call_operand.vmem [shape: f32[1,128], index: 2, kind: input, shape index: {}]
  %s3 = inlined_call_operand.hbm [shape: f32[16,128], index: 3, kind: output, shape index: {}]
  %s4 = sld [smem:[#allocation0]]
  $region53: #{tpu_custom_call.1} parent=0
    _
  %s6 = ssub.s32 1, %s4
  %s7 = scalar_select 0, %s6, %s4
  $region1: #{tpu_custom_call.1} parent=0
    #allocation2 [shape = 'u8[32768]{0}', space=vmem, size = 0x8000, scoped, tag = 'input window, operand 0']
    #allocation3 [shape = 's32[2]{0}', space=sflag, size = 0x8, scoped, tag = 'scoped memory for tpu_custom_call.1']
    #allocation4 [shape = 's32[2]{0}', space=sflag, size = 0x8, scoped, tag = 'scoped memory for tpu_custom_call.1']
    #allocation5 [shape = 'u8[262144]{0}', space=vmem, size = 0x40000, scoped, tag = 'input window, operand 1, single buffered']
    #allocation6 [shape = 's32[1]{0}', space=sflag, size = 0x4, scoped, tag = 'scoped memory for tpu_custom_call.1']
    #allocation7 [shape = 'u8[8192]{0}', space=vmem, size = 0x2000, scoped, tag = 'output window, operand 0']
    %8 = vsyncpa [#allocation3], 0
    %s9 = scalar_lea.sflag [#allocation3], 1
    %10 = vsyncpa %s9, 0
    %11 = vsyncpa [#allocation6], 0
    %12 = vsyncpa [#allocation4], 0
    %s13 = scalar_lea.sflag [#allocation4], 1
    %14 = vsyncpa %s13, 0
    loop: start=0, step=1, limit=4
    $region2: #{tpu_custom_call.1} parent=1 // loop_pre_header
      _
    $region3: #{tpu_custom_call.1} parent=1 // loop_header
      %s16 = sphi 0, %s20
      %p17 = scmp.ge.s32.totalorder %s16, 4
      %s23 = sphi 0, %s35
      %s24 = sphi 0, %s31
      %s25 = sphi 0, %s23
      %s26 = sphi 0, %s24
      %s27 = sphi 0, %s25
      %s28 = sphi 0, %s26
      %s38 = sphi 0, %s40
      %s41 = sphi 0, %s38
      %s42 = sphi 0, %s41
      %s58 = sphi 0, %s42
      %s64 = sphi 0, %s66
      %s67 = sphi 0, %s64
      %s68 = sphi 0, %s67
      %s84 = sphi 0, %s68
      %s90 = sphi 0, %s92
      %s93 = sphi 0, %s90
      %s94 = sphi 0, %s93
      %s110 = sphi 0, %s94
      %s118 = sphi 0, %s120
      %s121 = sphi 0, %s118
      %s122 = sphi 0, %s121
      %s138 = sphi 0, %s122
    $region4: #{tpu_custom_call.1} parent=1 // loop_header_branch
      %19 = sbr.rel (%p17) target = $region8
    $region5: #{tpu_custom_call.1} parent=1 // loop_body
      %s21 = ssub.s32 %s16, 1
      %s22 = ssub.s32 %s16, 2
      %s29 = sadd.s32 1, %s24
      %p30 = scmp.ge.s32.totalorder %s29, 2
      %s31 = scalar_select %p30, 0, %s29
      %s32 = sadd.s32 1, %s23
      %s33 = scalar_select %p30, %s32, %s23
      %p34 = scmp.ge.s32.totalorder %s33, 1
      %s35 = scalar_select %p34, 0, %s33
      %s36 = ssub.s32 %s24, %s31
      %p37 = scmp.eq.s32.totalorder %s36, 0
      %s39 = sadd.s32 %s38, 1
      %s40 = scalar_select %p37, %s38, %s39
      %p43 = pneg %p37
      %p44 = scmp.eq.s32.totalorder %s16, 1
      %p45 = por %p43, %p44
      %p46 = scmp.ne.s32.totalorder %s38, %s41
      %p47 = scmp.eq.s32.totalorder %s16, 0
      %p48 = por %p46, %p47
      %p49 = scmp.ne.s32.totalorder %s38, %s41
      %p50 = scmp.eq.s32.totalorder %s21, 1
      %p51 = por %p49, %p50
      %p52 = scmp.ne.s32.totalorder %s41, %s42
      %p53 = scmp.eq.s32.totalorder %s21, 0
      %p54 = por %p52, %p53
      %p55 = scmp.ne.s32.totalorder %s41, %s42
      %p56 = scmp.eq.s32.totalorder %s22, 1
      %p57 = por %p55, %p56
      %p59 = scmp.ne.s32.totalorder %s42, %s58
      %p60 = scmp.eq.s32.totalorder %s22, 0
      %p61 = por %p59, %p60
      %s62 = ssub.s32 %s23, %s35
      %p63 = scmp.eq.s32.totalorder %s62, 0
      %s65 = sadd.s32 %s64, 1
      %s66 = scalar_select %p63, %s64, %s65
      %p69 = pneg %p63
      %p70 = scmp.eq.s32.totalorder %s16, 1
      %p71 = por %p69, %p70
      %p72 = scmp.ne.s32.totalorder %s64, %s67
      %p73 = scmp.eq.s32.totalorder %s16, 0
      %p74 = por %p72, %p73
      %p75 = scmp.ne.s32.totalorder %s64, %s67
      %p76 = scmp.eq.s32.totalorder %s21, 1
      %p77 = por %p75, %p76
      %p78 = scmp.ne.s32.totalorder %s67, %s68
      %p79 = scmp.eq.s32.totalorder %s21, 0
      %p80 = por %p78, %p79
      %p81 = scmp.ne.s32.totalorder %s67, %s68
      %p82 = scmp.eq.s32.totalorder %s22, 1
      %p83 = por %p81, %p82
      %p85 = scmp.ne.s32.totalorder %s68, %s84
      %p86 = scmp.eq.s32.totalorder %s22, 0
      %p87 = por %p85, %p86
      %s88 = ssub.s32 %s23, %s35
      %p89 = scmp.eq.s32.totalorder %s88, 0
      %s91 = sadd.s32 %s90, 1
      %s92 = scalar_select %p89, %s90, %s91
      %p95 = pneg %p89
      %p96 = scmp.eq.s32.totalorder %s16, 1
      %p97 = por %p95, %p96
      %p98 = scmp.ne.s32.totalorder %s90, %s93
      %p99 = scmp.eq.s32.totalorder %s16, 0
      %p100 = por %p98, %p99
      %p101 = scmp.ne.s32.totalorder %s90, %s93
      %p102 = scmp.eq.s32.totalorder %s21, 1
      %p103 = por %p101, %p102
      %p104 = scmp.ne.s32.totalorder %s93, %s94
      %p105 = scmp.eq.s32.totalorder %s21, 0
      %p106 = por %p104, %p105
      %p107 = scmp.ne.s32.totalorder %s93, %s94
      %p108 = scmp.eq.s32.totalorder %s22, 1
      %p109 = por %p107, %p108
      %p111 = scmp.ne.s32.totalorder %s94, %s110
      %p112 = scmp.eq.s32.totalorder %s22, 0
      %p113 = por %p111, %p112
      %s114 = ssub.s32 %s24, %s31
      %s115 = ssub.s32 %s23, %s35
      %s116 = sor.u32 %s114, %s115
      %p117 = scmp.eq.s32.totalorder %s116, 0
      %s119 = sadd.s32 %s118, 1
      %s120 = scalar_select %p117, %s118, %s119
      %p123 = pneg %p117
      %p124 = scmp.eq.s32.totalorder %s16, 1
      %p125 = por %p123, %p124
      %p126 = scmp.ne.s32.totalorder %s118, %s121
      %p127 = scmp.eq.s32.totalorder %s16, 0
      %p128 = por %p126, %p127
      %p129 = scmp.ne.s32.totalorder %s118, %s121
      %p130 = scmp.eq.s32.totalorder %s21, 1
      %p131 = por %p129, %p130
      %p132 = scmp.ne.s32.totalorder %s121, %s122
      %p133 = scmp.eq.s32.totalorder %s21, 0
      %p134 = por %p132, %p133
      %p135 = scmp.ne.s32.totalorder %s121, %s122
      %p136 = scmp.eq.s32.totalorder %s22, 1
      %p137 = por %p135, %p136
      %p139 = scmp.ne.s32.totalorder %s122, %s138
      %p140 = scmp.eq.s32.totalorder %s22, 0
      %p141 = por %p139, %p140
      %p142 = scmp.le.s32.totalorder 1, %s16
      %p143 = scmp.lt.s32.totalorder %s16, 3
      %p144 = pnand %p142, %p143
      %p145 = pneg %p144
      // Predicated region
      $region9: #{tpu_custom_call.1} parent=5 // pred_check
        _
      $region10: #{tpu_custom_call.1} parent=5 // pred_check_branch
        %147 = sbr.rel (%p144) target = $region12
      $region11: #{tpu_custom_call.1} parent=5 // pred_region
        %s148 = ssub.s32 %s16, 1
        // Predicated region
        $region13: #{tpu_custom_call.1} parent=11 // pred_check
          %p149 = pneg %p80
        $region14: #{tpu_custom_call.1} parent=11 // pred_check_branch
          %151 = sbr.rel (%p149) target = $region16
        $region15: #{tpu_custom_call.1} parent=11 // pred_region
          %s153 = ssub.s32 8192, 8192
          %154 = vsyncadd [#allocation6], %s153
          %s155 = smul.addr %s25, 128
          %s156 = scalar_lea.hbm %s1, %s155
          %s157 = sshll.u32 [#allocation5], 4
          %s158 = int_to_ptr.vmem [resolvable:$true] %s157
          %163 = dma.hbm_to_vmem [thread:$0]  %s156, 8192, %s158, [#allocation6], 128, 128, 8
        $region16: #{tpu_custom_call.1} parent=11 // pred_fallthru
          _
        // Predicated region
        $region17: #{tpu_custom_call.1} parent=11 // pred_check
          %p164 = pneg %p106
        $region18: #{tpu_custom_call.1} parent=11 // pred_check_branch
          %166 = sbr.rel (%p164) target = $region20
        $region19: #{tpu_custom_call.1} parent=11 // pred_region
          %p167 = scmp.lt.s32.totalorder %s25, 0
          %s168 = scalar_select %p167, %s25, 0
          %s169 = scalar_lea.vmem %s2, %s168
        $region20: #{tpu_custom_call.1} parent=11 // pred_fallthru
          _
      $region12: #{tpu_custom_call.1} parent=5 // pred_fallthru
        _
      %p170 = scmp.lt.s32.totalorder %s16, 2
      // Predicated region
      $region21: #{tpu_custom_call.1} parent=5 // pred_check
        %p171 = pneg %p170
      $region22: #{tpu_custom_call.1} parent=5 // pred_check_branch
        %173 = sbr.rel (%p171) target = $region24
      $region23: #{tpu_custom_call.1} parent=5 // pred_region
        // Predicated region
        $region25: #{tpu_custom_call.1} parent=23 // pred_check
          %p174 = pneg %p48
        $region26: #{tpu_custom_call.1} parent=23 // pred_check_branch
          %176 = sbr.rel (%p174) target = $region28
        $region27: #{tpu_custom_call.1} parent=23 // pred_region
          %s177 = sand.u32 %s38, 1
          %s178 = scalar_lea.sflag [#allocation3], %s177
          %s179 = sand.u32 %s38, 1
          %s180 = smul.addr %s179, 32
          %s181 = scalar_lea.vmem [#allocation2], %s180
          %s183 = ssub.s32 512, 512
          %184 = vsyncadd %s178, %s183
          %s185 = smul.addr %s24, 4
          %s186 = smul.addr %s185, 128
          %s187 = scalar_lea.hbm %s0, %s186
          %s189 = sshll.u32 %s181, 4
          %s190 = int_to_ptr.vmem [resolvable:$true] %s189
          %192 = dma.hbm_to_vmem [thread:$0]  %s187, 512, %s190, %s178
        $region28: #{tpu_custom_call.1} parent=23 // pred_fallthru
          _
      $region24: #{tpu_custom_call.1} parent=5 // pred_fallthru
        _
      %p193 = scmp.le.s32.totalorder 1, %s16
      %p194 = scmp.lt.s32.totalorder %s16, 3
      %p195 = pnand %p193, %p194
      %p196 = pneg %p195
      // Predicated region
      $region29: #{tpu_custom_call.1} parent=5 // pred_check
        _
      $region30: #{tpu_custom_call.1} parent=5 // pred_check_branch
        %198 = sbr.rel (%p195) target = $region32
      $region31: #{tpu_custom_call.1} parent=5 // pred_region
        %s199 = ssub.s32 %s16, 1
        %s200 = sand.u32 %s41, 1
        %s201 = scalar_lea.sflag [#allocation3], %s200
        %s202 = sand.u32 %s41, 1
        %s203 = smul.addr %s202, 32
        %s204 = scalar_lea.vmem [#allocation2], %s203
        // Predicated region
        $region33: #{tpu_custom_call.1} parent=31 // pred_check
          %p205 = pneg %p54
        $region34: #{tpu_custom_call.1} parent=31 // pred_check_branch
          %207 = sbr.rel (%p205) target = $region36
        $region35: #{tpu_custom_call.1} parent=31 // pred_region
          %208 = dma.done %s201, 512
        $region36: #{tpu_custom_call.1} parent=31 // pred_fallthru
          _
        // Predicated region
        $region37: #{tpu_custom_call.1} parent=31 // pred_check
          %p209 = pneg %p80
        $region38: #{tpu_custom_call.1} parent=31 // pred_check_branch
          %211 = sbr.rel (%p209) target = $region40
        $region39: #{tpu_custom_call.1} parent=31 // pred_region
          %212 = dma.done [#allocation6], 8192
        $region40: #{tpu_custom_call.1} parent=31 // pred_fallthru
          _
        %s213 = sand.u32 %s41, 1
        %s214 = scalar_lea.sflag [#allocation3], %s213
        %s215 = sand.u32 %s41, 1
        %s216 = smul.addr %s215, 32
        %s217 = scalar_lea.vmem [#allocation2], %s216
        %p218 = pneg %p54
        %p219 = pneg %p51
        %p220 = pneg %p80
        %p221 = pneg %p77
        %p222 = scmp.lt.s32.totalorder %s25, 0
        %s223 = scalar_select %p222, %s25, 0
        %s224 = scalar_lea.vmem %s2, %s223
        %p225 = pneg %p106
        %p226 = pneg %p103
        %p227 = pneg %p134
        %p228 = pneg %p131
        %s229 = sand.u32 %s121, 1
        %s230 = scalar_lea.sflag [#allocation4], %s229
        %s231 = sand.u32 %s121, 1
        %s232 = smul.addr %s231, 8
        %s233 = scalar_lea.vmem [#allocation7], %s232
        %p234 = scmp.lt.s32.totalorder %s25, 0
        %s235 = scalar_select %p234, %s25, 0
        %s236 = scalar_lea.vmem %s2, %s235
        %v237 = vld [vmem:[%s204] sm:$0xff]
        %v238 = vld [vmem:[%s204 + $0x8] sm:$0xff]
        %v239 = vld [vmem:[%s204 + $0x10] sm:$0xff]
        %v240 = vld [vmem:[%s204 + $0x18] sm:$0xff]
        %v241 = vld [vmem:[#allocation5] sm:$0xff]
        %v242 = vld [vmem:[#allocation5 + $0x8] sm:$0xff]
        %v243 = vld [vmem:[#allocation5 + $0x10] sm:$0xff]
        %v244 = vld [vmem:[#allocation5 + $0x18] sm:$0xff]
        %v245 = vld [vmem:[#allocation5 + $0x20] sm:$0xff]
        %v246 = vld [vmem:[#allocation5 + $0x28] sm:$0xff]
        %v247 = vld [vmem:[#allocation5 + $0x30] sm:$0xff]
        %v248 = vld [vmem:[#allocation5 + $0x38] sm:$0xff]
        %v249 = vld [vmem:[#allocation5 + $0x40] sm:$0xff]
        %v250 = vld [vmem:[#allocation5 + $0x48] sm:$0xff]
        %v251 = vld [vmem:[#allocation5 + $0x50] sm:$0xff]
        %v252 = vld [vmem:[#allocation5 + $0x58] sm:$0xff]
        %v253 = vld [vmem:[#allocation5 + $0x60] sm:$0xff]
        %v254 = vld [vmem:[#allocation5 + $0x68] sm:$0xff]
        %v255 = vld [vmem:[#allocation5 + $0x70] sm:$0xff]
        %v256 = vld [vmem:[#allocation5 + $0x78] sm:$0xff]
        %v257 = vld [vmem:[#allocation5 + $0x80] sm:$0xff]
        %v258 = vld [vmem:[#allocation5 + $0x88] sm:$0xff]
        %v259 = vld [vmem:[#allocation5 + $0x90] sm:$0xff]
        %v260 = vld [vmem:[#allocation5 + $0x98] sm:$0xff]
        %v261 = vld [vmem:[#allocation5 + $0xa0] sm:$0xff]
        %v262 = vld [vmem:[#allocation5 + $0xa8] sm:$0xff]
        %v263 = vld [vmem:[#allocation5 + $0xb0] sm:$0xff]
        %v264 = vld [vmem:[#allocation5 + $0xb8] sm:$0xff]
        %v265 = vld [vmem:[#allocation5 + $0xc0] sm:$0xff]
        %v266 = vld [vmem:[#allocation5 + $0xc8] sm:$0xff]
        %v267 = vld [vmem:[#allocation5 + $0xd0] sm:$0xff]
        %v268 = vld [vmem:[#allocation5 + $0xd8] sm:$0xff]
        %v269 = vld [vmem:[#allocation5 + $0xe0] sm:$0xff]
        %v270 = vld [vmem:[#allocation5 + $0xe8] sm:$0xff]
        %v271 = vld [vmem:[#allocation5 + $0xf0] sm:$0xff]
        %v272 = vld [vmem:[#allocation5 + $0xf8] sm:$0xff]
        %v273 = vld [vmem:[#allocation5 + $0x100] sm:$0xff]
        %v274 = vld [vmem:[#allocation5 + $0x108] sm:$0xff]
        %v275 = vld [vmem:[#allocation5 + $0x110] sm:$0xff]
        %v276 = vld [vmem:[#allocation5 + $0x118] sm:$0xff]
        %v277 = vld [vmem:[#allocation5 + $0x120] sm:$0xff]
        %v278 = vld [vmem:[#allocation5 + $0x128] sm:$0xff]
        %v279 = vld [vmem:[#allocation5 + $0x130] sm:$0xff]
        %v280 = vld [vmem:[#allocation5 + $0x138] sm:$0xff]
        %v281 = vld [vmem:[#allocation5 + $0x140] sm:$0xff]
        %v282 = vld [vmem:[#allocation5 + $0x148] sm:$0xff]
        %v283 = vld [vmem:[#allocation5 + $0x150] sm:$0xff]
        %v284 = vld [vmem:[#allocation5 + $0x158] sm:$0xff]
        %v285 = vld [vmem:[#allocation5 + $0x160] sm:$0xff]
        %v286 = vld [vmem:[#allocation5 + $0x168] sm:$0xff]
        %v287 = vld [vmem:[#allocation5 + $0x170] sm:$0xff]
        %v288 = vld [vmem:[#allocation5 + $0x178] sm:$0xff]
        %v289 = vld [vmem:[#allocation5 + $0x180] sm:$0xff]
        %v290 = vld [vmem:[#allocation5 + $0x188] sm:$0xff]
        %v291 = vld [vmem:[#allocation5 + $0x190] sm:$0xff]
        %v292 = vld [vmem:[#allocation5 + $0x198] sm:$0xff]
        %v293 = vld [vmem:[#allocation5 + $0x1a0] sm:$0xff]
        %v294 = vld [vmem:[#allocation5 + $0x1a8] sm:$0xff]
        %v295 = vld [vmem:[#allocation5 + $0x1b0] sm:$0xff]
        %v296 = vld [vmem:[#allocation5 + $0x1b8] sm:$0xff]
        %v297 = vld [vmem:[#allocation5 + $0x1c0] sm:$0xff]
        %v298 = vld [vmem:[#allocation5 + $0x1c8] sm:$0xff]
        %v299 = vld [vmem:[#allocation5 + $0x1d0] sm:$0xff]
        %v300 = vld [vmem:[#allocation5 + $0x1d8] sm:$0xff]
        %v301 = vld [vmem:[#allocation5 + $0x1e0] sm:$0xff]
        %v302 = vld [vmem:[#allocation5 + $0x1e8] sm:$0xff]
        %v303 = vld [vmem:[#allocation5 + $0x1f0] sm:$0xff]
        %v304 = vld [vmem:[#allocation5 + $0x1f8] sm:$0xff]
        %v305 = vld [vmem:[%s236] sm:$0x1]
        %v307 = vlaneseq
        %v308 = vshrl.u32 %v307, 7
        %v309 = vsub.s32 0, %v308
        %v310 = vrot.slane %v305, %v309
        %312 = vmatprep.subr.mxu0 0.0
        %313 = vmatpush1.msra.mxu0 %v241
        %314 = vmatprep.subr.mxu0 0.0
        %315 = vmatpush1.msra.mxu0 %v242
        %316 = vmatprep.subr.mxu0 0.0
        %317 = vmatpush1.msra.mxu0 %v243
        %318 = vmatprep.subr.mxu0 0.0
        %319 = vmatpush1.msra.mxu0 %v244
        %320 = vmatprep.subr.mxu0 0.0
        %321 = vmatpush1.msra.mxu0 %v245
        %322 = vmatprep.subr.mxu0 0.0
        %323 = vmatpush1.msra.mxu0 %v246
        %324 = vmatprep.subr.mxu0 0.0
        %325 = vmatpush1.msra.mxu0 %v247
        %326 = vmatprep.subr.mxu0 0.0
        %327 = vmatpush1.msra.mxu0 %v248
        %328 = vmatprep.subr.mxu0 0.0
        %329 = vmatpush1.msra.mxu0 %v249
        %330 = vmatprep.subr.mxu0 0.0
        %331 = vmatpush1.msra.mxu0 %v250
        %332 = vmatprep.subr.mxu0 0.0
        %333 = vmatpush1.msra.mxu0 %v251
        %334 = vmatprep.subr.mxu0 0.0
        %335 = vmatpush1.msra.mxu0 %v252
        %336 = vmatprep.subr.mxu0 0.0
        %337 = vmatpush1.msra.mxu0 %v253
        %338 = vmatprep.subr.mxu0 0.0
        %339 = vmatpush1.msra.mxu0 %v254
        %340 = vmatprep.subr.mxu0 0.0
        %341 = vmatpush1.msra.mxu0 %v255
        %342 = vmatprep.subr.mxu0 0.0
        %343 = vmatpush1.msra.mxu0 %v256
        %344 = vmatprep.subr.mxu0 0.0
        %345 = vmatpush1.msra.mxu0 %v257
        %346 = vmatprep.subr.mxu0 0.0
        %347 = vmatpush1.msra.mxu0 %v258
        %348 = vmatprep.subr.mxu0 0.0
        %349 = vmatpush1.msra.mxu0 %v259
        %350 = vmatprep.subr.mxu0 0.0
        %351 = vmatpush1.msra.mxu0 %v260
        %352 = vmatprep.subr.mxu0 0.0
        %353 = vmatpush1.msra.mxu0 %v261
        %354 = vmatprep.subr.mxu0 0.0
        %355 = vmatpush1.msra.mxu0 %v262
        %356 = vmatprep.subr.mxu0 0.0
        %357 = vmatpush1.msra.mxu0 %v263
        %358 = vmatprep.subr.mxu0 0.0
        %359 = vmatpush1.msra.mxu0 %v264
        %360 = vmatprep.subr.mxu0 0.0
        %361 = vmatpush1.msra.mxu0 %v265
        %362 = vmatprep.subr.mxu0 0.0
        %363 = vmatpush1.msra.mxu0 %v266
        %364 = vmatprep.subr.mxu0 0.0
        %365 = vmatpush1.msra.mxu0 %v267
        %366 = vmatprep.subr.mxu0 0.0
        %367 = vmatpush1.msra.mxu0 %v268
        %368 = vmatprep.subr.mxu0 0.0
        %369 = vmatpush1.msra.mxu0 %v269
        %370 = vmatprep.subr.mxu0 0.0
        %371 = vmatpush1.msra.mxu0 %v270
        %372 = vmatprep.subr.mxu0 0.0
        %373 = vmatpush1.msra.mxu0 %v271
        %374 = vmatprep.subr.mxu0 0.0
        %375 = vmatpush1.msra.mxu0 %v272
        %376 = vmatprep.mubr.f32.mxu0 %v238
        %377 = vmatmul.mubr.f32.gmra.mrb[0].mxu0 %v237
        %v378 = vpop.f32.mrb[0].mxu0
        %v379 = vadd.f32 %v310, %v378
        %v380 = vpop.f32.mrb[0].mxu0
        %381 = vdwg.mxu0
        %382 = vmatprep.subr.mxu0 0.0
        %383 = vmatpush1.msra.mxu0 %v273
        %384 = vmatprep.subr.mxu0 0.0
        %385 = vmatpush1.msra.mxu0 %v274
        %386 = vmatprep.subr.mxu0 0.0
        %387 = vmatpush1.msra.mxu0 %v275
        %388 = vmatprep.subr.mxu0 0.0
        %389 = vmatpush1.msra.mxu0 %v276
        %390 = vmatprep.subr.mxu0 0.0
        %391 = vmatpush1.msra.mxu0 %v277
        %392 = vmatprep.subr.mxu0 0.0
        %393 = vmatpush1.msra.mxu0 %v278
        %394 = vmatprep.subr.mxu0 0.0
        %395 = vmatpush1.msra.mxu0 %v279
        %396 = vmatprep.subr.mxu0 0.0
        %397 = vmatpush1.msra.mxu0 %v280
        %398 = vmatprep.subr.mxu0 0.0
        %399 = vmatpush1.msra.mxu0 %v281
        %400 = vmatprep.subr.mxu0 0.0
        %401 = vmatpush1.msra.mxu0 %v282
        %402 = vmatprep.subr.mxu0 0.0
        %403 = vmatpush1.msra.mxu0 %v283
        %404 = vmatprep.subr.mxu0 0.0
        %405 = vmatpush1.msra.mxu0 %v284
        %406 = vmatprep.subr.mxu0 0.0
        %407 = vmatpush1.msra.mxu0 %v285
        %408 = vmatprep.subr.mxu0 0.0
        %409 = vmatpush1.msra.mxu0 %v286
        %410 = vmatprep.subr.mxu0 0.0
        %411 = vmatpush1.msra.mxu0 %v287
        %412 = vmatprep.subr.mxu0 0.0
        %413 = vmatpush1.msra.mxu0 %v288
        %414 = vmatprep.subr.mxu0 0.0
        %415 = vmatpush1.msra.mxu0 %v289
        %416 = vmatprep.subr.mxu0 0.0
        %417 = vmatpush1.msra.mxu0 %v290
        %418 = vmatprep.subr.mxu0 0.0
        %419 = vmatpush1.msra.mxu0 %v291
        %420 = vmatprep.subr.mxu0 0.0
        %421 = vmatpush1.msra.mxu0 %v292
        %422 = vmatprep.subr.mxu0 0.0
        %423 = vmatpush1.msra.mxu0 %v293
        %424 = vmatprep.subr.mxu0 0.0
        %425 = vmatpush1.msra.mxu0 %v294
        %426 = vmatprep.subr.mxu0 0.0
        %427 = vmatpush1.msra.mxu0 %v295
        %428 = vmatprep.subr.mxu0 0.0
        %429 = vmatpush1.msra.mxu0 %v296
        %430 = vmatprep.subr.mxu0 0.0
        %431 = vmatpush1.msra.mxu0 %v297
        %432 = vmatprep.subr.mxu0 0.0
        %433 = vmatpush1.msra.mxu0 %v298
        %434 = vmatprep.subr.mxu0 0.0
        %435 = vmatpush1.msra.mxu0 %v299
        %436 = vmatprep.subr.mxu0 0.0
        %437 = vmatpush1.msra.mxu0 %v300
        %438 = vmatprep.subr.mxu0 0.0
        %439 = vmatpush1.msra.mxu0 %v301
        %440 = vmatprep.subr.mxu0 0.0
        %441 = vmatpush1.msra.mxu0 %v302
        %442 = vmatprep.subr.mxu0 0.0
        %443 = vmatpush1.msra.mxu0 %v303
        %444 = vmatprep.subr.mxu0 0.0
        %445 = vmatpush1.msra.mxu0 %v304
        %446 = vmatprep.mubr.f32.mxu0 %v240
        %447 = vmatmul.mubr.f32.gmra.mrb[0].mxu0 %v239
        %v448 = vpop.f32.mrb[0].mxu0
        %v449 = vadd.f32 %v379, %v448
        %v450 = vpop.f32.mrb[0].mxu0
        %451 = vdwg.mxu0
        %452 = vst [vmem:[%s233] sm:$0xff] %v449
        %s453 = sand.u32 %s121, 1
        %s454 = scalar_lea.sflag [#allocation4], %s453
        %s455 = sand.u32 %s121, 1
        %s456 = smul.addr %s455, 8
        %s457 = scalar_lea.vmem [#allocation7], %s456
        // Predicated region
        $region41: #{tpu_custom_call.1} parent=31 // pred_check
          %p458 = pneg %p131
        $region42: #{tpu_custom_call.1} parent=31 // pred_check_branch
          %460 = sbr.rel (%p458) target = $region44
        $region43: #{tpu_custom_call.1} parent=31 // pred_region
          %s462 = ssub.s32 128, 128
          %463 = vsyncadd %s454, %s462
          %s464 = sadd.s32 %s25, %s26
          %s465 = smul.addr %s464, 128
          %s466 = scalar_lea.hbm %s3, %s465
          %s468 = sshll.u32 %s457, 4
          %s469 = int_to_ptr.vmem [resolvable:$true] %s468
          %471 = dma.vmem_to_hbm [thread:$0]  %s469, 128, %s466, %s454
        $region44: #{tpu_custom_call.1} parent=31 // pred_fallthru
          _
      $region32: #{tpu_custom_call.1} parent=5 // pred_fallthru
        _
      %p472 = scmp.le.s32.totalorder 2, %s16
      // Predicated region
      $region45: #{tpu_custom_call.1} parent=5 // pred_check
        %p473 = pneg %p472
      $region46: #{tpu_custom_call.1} parent=5 // pred_check_branch
        %475 = sbr.rel (%p473) target = $region48
      $region47: #{tpu_custom_call.1} parent=5 // pred_region
        %s476 = ssub.s32 %s16, 2
        // Predicated region
        $region49: #{tpu_custom_call.1} parent=47 // pred_check
          %p477 = pneg %p137
        $region50: #{tpu_custom_call.1} parent=47 // pred_check_branch
          %479 = sbr.rel (%p477) target = $region52
        $region51: #{tpu_custom_call.1} parent=47 // pred_region
          %s480 = sand.u32 %s122, 1
          %s481 = scalar_lea.sflag [#allocation4], %s480
          %s482 = sand.u32 %s122, 1
          %s483 = smul.addr %s482, 8
          %s484 = scalar_lea.vmem [#allocation7], %s483
          %485 = dma.done %s481, 128
        $region52: #{tpu_custom_call.1} parent=47 // pred_fallthru
          _
      $region48: #{tpu_custom_call.1} parent=5 // pred_fallthru
        _
    $region6: #{tpu_custom_call.1} parent=1 // loop_footer
      %s20 = sadd.s32 1, %s16
    $region7: #{tpu_custom_call.1} parent=1 // loop_footer_branch
      %15 = sbr.rel target = $region3
    $region8: #{tpu_custom_call.1} parent=1 // loop_exit
      _
    %486 = vsyncpa [#allocation3], 1
    %s487 = scalar_lea.sflag [#allocation3], 1
    %488 = vsyncpa %s487, 1
    %489 = vsyncpa [#allocation6], 1
    %490 = vsyncpa [#allocation4], 1
    %s491 = scalar_lea.sflag [#allocation4], 1
    %492 = vsyncpa %s491, 1

</llo_original>
